<compile_context>
chip_gen: v7x
topology: tpu7x:2x2x1
jax: 0.10.0
libtpu: 0.0.40
codegen_flags: <defaults>
</compile_context>

<pallas_src>
import math

import jax
import jax.numpy as jnp
from jax.experimental import pallas as pl
from jax.experimental.pallas import tpu as pltpu


def _round_up(v, m):
    return ((v + m - 1) // m) * m


# ----------------------------------------------------------------------------
# Kernel
# ----------------------------------------------------------------------------
def _make_kernel(groups):
    """groups: static tuple of (feature_indices, row_offsets, lane_offset).

    Kernel refs: x_ref (tb, F) int32, one RHS ref per group
    (C_group_pad, W_group_pad), out_ref (tb, W_total_pad)."""

    def kernel(x_ref, *refs):
        *rhs_refs, out_ref = refs
        tb = x_ref.shape[0]
        xt = x_ref[...]                              # load the index tile once

        iota_cache = {}
        for (feats, row_offs, lane_off), rhs_ref in zip(groups, rhs_refs):
            cg_pad, wg_pad = rhs_ref.shape
            col_ids = iota_cache.get(cg_pad)
            if col_ids is None:
                col_ids = jax.lax.broadcasted_iota(jnp.int32, (tb, cg_pad), 1)
                iota_cache[cg_pad] = col_ids

            # Multi-hot LHS: exactly one 1 per feature, at row_off_f + x[:, f].
            # Row windows are disjoint and the RHS is block-diagonal, so a
            # single matmul gathers every feature of the group at once.
            hit = None
            for f, off in zip(feats, row_offs):
                m = col_ids == (off + xt[:, f:f + 1])          # (tb, cg_pad)
                hit = m if hit is None else jnp.logical_or(hit, m)
            onehot = hit.astype(rhs_ref.dtype)                 # exact 0/1

            precision = (jax.lax.Precision.HIGHEST
                         if rhs_ref.dtype == jnp.float32 else None)
            acc = jnp.dot(onehot, rhs_ref[...],
                          preferred_element_type=jnp.float32,
                          precision=precision)                 # (tb, wg_pad)

            # Static, lane-aligned slice of the output slab (unmasked store
            # whenever wg_pad % 128 == 0, which grouping guarantees for the
            # common D in {32, 64, 128, ...}).
            out_ref[:, lane_off:lane_off + wg_pad] = acc.astype(out_ref.dtype)

    return kernel


# ----------------------------------------------------------------------------
# Table packing (block-diagonal, per feature-group)
# ----------------------------------------------------------------------------
def _pick_group_size(d_embedding, num_features):
    """Smallest #features per group whose combined width is a multiple of 128
    lanes (unmasked stores); fallback: >=256 output lanes per group."""
    if d_embedding % 128 == 0:
        return 1
    g = math.lcm(d_embedding, 128) // d_embedding
    if g <= min(num_features, 16):
        return g
    return max(1, min(num_features, -(-256 // d_embedding)))


def prepare_grouped_tables(weights, d_embedding, *, group_size=None, dtype=None):
    """Pack per-feature embedding tables (list of [c_i+1, D] arrays, the exact
    analogue of the nn.ModuleList weights) into per-group block-diagonal RHS
    matrices for the fused gather matmul.

    Returns (group_rhs, groups):
      group_rhs: list of arrays; group g has shape (sum_i ceil8(rows_i), W_g)
                 with W_g = (#features in g) * D, last group column-padded so
                 the total output width is round_up(F*D, 128).
      groups:    static metadata (feature_indices, row_offsets, lane_offset).
    """
    num_features = len(weights)
    d = d_embedding
    if dtype is None:
        dtype = weights[0].dtype
    if group_size is None:
        group_size = _pick_group_size(d, num_features)

    w_total_pad = _round_up(num_features * d, 128)
    group_rhs, groups = [], []
    lane_off = 0
    for g0 in range(0, num_features, group_size):
        feats = tuple(range(g0, min(g0 + group_size, num_features)))
        width = len(feats) * d
        is_last = (g0 + group_size) >= num_features
        width_pad = (w_total_pad - lane_off) if is_last else width

        rows = [weights[f].shape[0] for f in feats]
        rows_pad = [_round_up(r, 8) for r in rows]
        cg_pad = sum(rows_pad)

        rhs = jnp.zeros((cg_pad, width_pad), dtype)
        row_offs = []
        r_off = 0
        for j, (f, r, rp) in enumerate(zip(feats, rows, rows_pad)):
            rhs = rhs.at[r_off:r_off + r, j * d:(j + 1) * d].set(
                weights[f].astype(dtype))
            row_offs.append(r_off)
            r_off += rp
        group_rhs.append(rhs)
        groups.append((feats, tuple(row_offs), lane_off))
        lane_off += width_pad
    return group_rhs, tuple(groups)


# ----------------------------------------------------------------------------
# VMEM budgeting / batch-tile selection
# ----------------------------------------------------------------------------
def _vmem_capacity_bytes():
    try:
        cap = int(pltpu.get_tpu_info().vmem_capacity_bytes)
        if cap > 0:
            return cap
    except Exception:
        pass
    return 64 << 20          # conservative fallback (v7x per-TensorCore VMEM)


def _footprint_bytes(tb, num_features, w_total_pad, rhs_bytes,
                     cg_max, wg_max, tbl_itemsize, out_itemsize):
    x_buf = 2 * tb * num_features * 4                 # double-buffered indices
    out_buf = 2 * tb * w_total_pad * out_itemsize     # double-buffered output
    tbl_buf = rhs_bytes                               # single-buffered tables
    # live temporaries for one group: bool mask + one-hot + f32 accumulator
    work = tb * (cg_max * (1 + tbl_itemsize) + wg_max * 4)
    return x_buf + out_buf + tbl_buf + 2 * work       # 2x: overlap headroom


def _pick_tb(batch, budget, footprint_fn):
    """Largest batch tile (multiple of 8) fitting the VMEM budget, capped so
    the grid has >= 2 steps (v7x megacore: 2 TensorCores share the grid)."""
    b_pad8 = _round_up(max(batch, 1), 8)
    cap = b_pad8
    if b_pad8 >= 16:
        cap = max(8, (b_pad8 // 2) // 8 * 8)
    for cand in (2048, 1024, 512, 256, 128, 64, 32, 16, 8):
        if cand > cap:
            continue
        if footprint_fn(cand) <= budget:
            return cand
    return 8


# ----------------------------------------------------------------------------
# Wrapper
# ----------------------------------------------------------------------------
def categorical_embeddings_1d(x, group_rhs, groups, num_features, d_embedding,
                              *, tb=None, out_dtype=None):
    """x: [..., F] integer -> [..., F, D], matching
    torch.stack([emb_i(x[..., i]) for i], dim=-2)."""
    d = d_embedding
    f = num_features
    assert x.shape[-1] == f
    lead = x.shape[:-1]
    batch = math.prod(lead) if lead else 1
    x2 = x.reshape(batch, f).astype(jnp.int32)

    tbl_dtype = group_rhs[0].dtype
    if out_dtype is None:
        out_dtype = tbl_dtype                 # bf16 default: halves writeback
    out_itemsize = jnp.dtype(out_dtype).itemsize
    tbl_itemsize = jnp.dtype(tbl_dtype).itemsize

    w_total_pad = groups[-1][2] + group_rhs[-1].shape[1]
    rhs_bytes = sum(g.size * g.dtype.itemsize for g in group_rhs)
    cg_max = max(g.shape[0] for g in group_rhs)
    wg_max = max(g.shape[1] for g in group_rhs)

    # Generation-aware budget (v5e/v6e: 128 MiB VMEM, v7x: 64 MiB per core).
    vmem_cap = _vmem_capacity_bytes()
    budget = (vmem_cap * 3) // 4

    def fp(cand_tb):
        return _footprint_bytes(cand_tb, f, w_total_pad, rhs_bytes,
                                cg_max, wg_max, tbl_itemsize, out_itemsize)

    if tb is None:
        tb = _pick_tb(batch, budget, fp)
    assert tb % 8 == 0, "batch tile must be a multiple of 8"
    # TODO(synk): tables too large even for tb=8 need an HBM-resident
    # (memory_space=pl.ANY) row-tiled RHS with pltpu.emit_pipeline accumulation.

    b_pad = _round_up(batch, tb)
    x_p = x2 if b_pad == batch else jnp.pad(x2, ((0, b_pad - batch), (0, 0)))
    grid = (b_pad // tb,)

    vmem_limit = int(min(vmem_cap, max(32 << 20, fp(tb) + rhs_bytes + (8 << 20))))
    cost = pl.CostEstimate(
        flops=2 * b_pad * sum(g.shape[0] * g.shape[1] for g in group_rhs),
        transcendentals=0,
        bytes_accessed=rhs_bytes + x_p.size * 4 + b_pad * w_total_pad * out_itemsize,
    )

    def build(single_buffer_tables):
        rhs_kwargs = ({"pipeline_mode": pl.Buffered(1)}
                      if single_buffer_tables else {})
        rhs_specs = [
            pl.BlockSpec(tuple(g.shape), lambda b: (0, 0), **rhs_kwargs)
            for g in group_rhs
        ]
        return pl.pallas_call(
            _make_kernel(groups),
            out_shape=jax.ShapeDtypeStruct((b_pad, w_total_pad), out_dtype),
            grid_spec=pltpu.PrefetchScalarGridSpec(
                num_scalar_prefetch=0,
                grid=grid,
                in_specs=[pl.BlockSpec((tb, f), lambda b: (b, 0))] + rhs_specs,
                out_specs=pl.BlockSpec((tb, w_total_pad), lambda b: (b, 0)),
            ),
            compiler_params=pltpu.CompilerParams(
                dimension_semantics=("parallel",),
                vmem_limit_bytes=vmem_limit,
            ),
            cost_estimate=cost,
        )

    try:
        # Constant-index tables only need one resident buffer.
        out_flat = build(True)(x_p, *group_rhs)
    except Exception:
        # Fallback if this JAX/Mosaic version rejects single buffering.
        out_flat = build(False)(x_p, *group_rhs)

    # Drop batch + lane padding (cheap) and reshape (no transpose needed).
    out = out_flat[:batch, :f * d]
    return out.reshape(*lead, f, d)


# ----------------------------------------------------------------------------
# Parameter construction (mimics nn.Embedding(c+1, d) + _init_rsqrt_uniform_)
# ----------------------------------------------------------------------------
def init_categorical_embeddings(key, cardinalities, d_embedding,
                                dtype=jnp.bfloat16):
    """Per-feature nn.Embedding(c+1, d) weights ~ U(-1/sqrt(d), 1/sqrt(d)).
    bf16 by default: the one-hot gather is exact in bf16 and halves table +
    output HBM traffic (the dominant stream for small cardinalities)."""
    bound = 1.0 / math.sqrt(d_embedding)
    ws = []
    for i, c in enumerate(cardinalities):
        k = jax.random.fold_in(key, i)
        w = jax.random.uniform(k, (c + 1, d_embedding), jnp.float32,
                               -bound, bound)
        ws.append(w.astype(dtype))
    return ws


# ----------------------------------------------------------------------------
# Demo / correctness check
# ----------------------------------------------------------------------------
if __name__ == "__main__":
    key = jax.random.PRNGKey(0)
    cardinalities = [5, 7, 3]          # F = 3 categorical features
    d_embedding = 32
    B = 16                             # batch

    # indices for feature i are in [0, cardinalities[i]] (nn.Embedding(c+1, d))
    idx_cols = []
    for i, c in enumerate(cardinalities):
        k = jax.random.fold_in(jax.random.PRNGKey(1), i)
        idx_cols.append(jax.random.randint(k, (B,), 0, c + 1, jnp.int32))
    x = jnp.stack(idx_cols, axis=-1)   # [B, F] int32

    # --- default bf16 path (exact gather, bf16 output) -----------------------
    weights = init_categorical_embeddings(key, cardinalities, d_embedding,
                                          dtype=jnp.bfloat16)
    group_rhs, groups = prepare_grouped_tables(weights, d_embedding)
    out = categorical_embeddings_1d(x, group_rhs, groups,
                                    len(cardinalities), d_embedding)
    out = jax.block_until_ready(out)

    ref = jnp.stack([weights[i][x[:, i]] for i in range(len(cardinalities))],
                    axis=-2)
    assert out.shape == (B, len(cardinalities), d_embedding)
    assert out.dtype == jnp.bfloat16
    assert jnp.allclose(out.astype(jnp.float32), ref.astype(jnp.float32))

    # --- f32 path (precision=HIGHEST keeps the MXU gather exact) -------------
    weights32 = init_categorical_embeddings(key, cardinalities, d_embedding,
                                            dtype=jnp.float32)
    rhs32, groups32 = prepare_grouped_tables(weights32, d_embedding)
    out32 = categorical_embeddings_1d(x, rhs32, groups32,
                                      len(cardinalities), d_embedding)
    out32 = jax.block_until_ready(out32)
    ref32 = jnp.stack([weights32[i][x[:, i]] for i in range(len(cardinalities))],
                      axis=-2)
    assert jnp.allclose(out32, ref32, atol=1e-6, rtol=1e-5)

    print("KERNEL_OK")
</pallas_src>

<mosaic_0001>
module attributes {stable_mosaic.version = 11 : i64} {
  func.func @kernel(%arg0: i32, %arg1: memref<8x3xi32, #tpu.memory_space<vmem>>, %arg2: memref<24x128xbf16, #tpu.memory_space<vmem>>, %arg3: memref<8x128xbf16, #tpu.memory_space<vmem>>) attributes {dimension_semantics = [#tpu.dimension_semantics<parallel>], iteration_bounds = array<i64: 2>, scalar_prefetch = 0 : i64, scratch_operands = 0 : i64, tpu.core_type = #tpu.core_type<tc>, window_params = [{transform_indices = @transform_0, window_bounds = array<i64: 8, 3>}, {pipeline_mode = #tpu.pipeline_mode<synchronous>, transform_indices = @transform_1, window_bounds = array<i64: 24, 128>}, {transform_indices = @transform_2, window_bounds = array<i64: 8, 128>}]} {
    %c0 = arith.constant 0 : index
    %c0_0 = arith.constant 0 : index
    %0 = vector.load %arg1[%c0, %c0_0] : memref<8x3xi32, #tpu.memory_space<vmem>>, vector<8x3xi32>
    %1 = tpu.iota {dimensions = array<i32: 1>} : vector<8x24xi32>
    %2 = vector.extract_strided_slice %0 {offsets = [0, 0], sizes = [8, 1], strides = [1, 1]} : vector<8x3xi32> to vector<8x1xi32>
    %c0_i32 = arith.constant 0 : i32
    %3 = vector.broadcast %c0_i32 : i32 to vector<8x1xi32>
    %4 = arith.addi %3, %2 : vector<8x1xi32>
    %5 = vector.broadcast %4 : vector<8x1xi32> to vector<8x24xi32>
    %6 = arith.cmpi eq, %1, %5 : vector<8x24xi32>
    %7 = vector.extract_strided_slice %0 {offsets = [0, 1], sizes = [8, 1], strides = [1, 1]} : vector<8x3xi32> to vector<8x1xi32>
    %c8_i32 = arith.constant 8 : i32
    %8 = vector.broadcast %c8_i32 : i32 to vector<8x1xi32>
    %9 = arith.addi %8, %7 : vector<8x1xi32>
    %10 = vector.broadcast %9 : vector<8x1xi32> to vector<8x24xi32>
    %11 = arith.cmpi eq, %1, %10 : vector<8x24xi32>
    %12 = arith.ori %6, %11 : vector<8x24xi1>
    %13 = vector.extract_strided_slice %0 {offsets = [0, 2], sizes = [8, 1], strides = [1, 1]} : vector<8x3xi32> to vector<8x1xi32>
    %c16_i32 = arith.constant 16 : i32
    %14 = vector.broadcast %c16_i32 : i32 to vector<8x1xi32>
    %15 = arith.addi %14, %13 : vector<8x1xi32>
    %16 = vector.broadcast %15 : vector<8x1xi32> to vector<8x24xi32>
    %17 = arith.cmpi eq, %1, %16 : vector<8x24xi32>
    %18 = arith.ori %12, %17 : vector<8x24xi1>
    %19 = arith.extui %18 : vector<8x24xi1> to vector<8x24xi32>
    %20 = arith.sitofp %19 : vector<8x24xi32> to vector<8x24xf32>
    %21 = arith.truncf %20 : vector<8x24xf32> to vector<8x24xbf16>
    %c0_1 = arith.constant 0 : index
    %c0_2 = arith.constant 0 : index
    %22 = vector.load %arg2[%c0_1, %c0_2] : memref<24x128xbf16, #tpu.memory_space<vmem>>, vector<24x128xbf16>
    %cst = arith.constant dense<0.000000e+00> : vector<8x128xf32>
    %23 = tpu.matmul %21, %22, %cst {dimension_numbers = #tpu.dot_dimension_numbers<[1], [0], [0], [1], [0, 0, 1, 1], [], []>} : vector<8x24xbf16>, vector<24x128xbf16>, vector<8x128xf32> -> vector<8x128xf32>
    %24 = arith.truncf %23 : vector<8x128xf32> to vector<8x128xbf16>
    %c0_3 = arith.constant 0 : index
    %c0_4 = arith.constant 0 : index
    %25 = vector.load %arg3[%c0_3, %c0_4] : memref<8x128xbf16, #tpu.memory_space<vmem>>, vector<8x128xbf16>
    tpu.vector_store %arg3[%c0_3, %c0_4], %24 {strides = array<i32>} : memref<8x128xbf16, #tpu.memory_space<vmem>>, vector<8x128xbf16>,
    return
  }
  func.func @transform_0(%arg0: i32) -> (i32, i32) {
    %c0_i32 = arith.constant 0 : i32
    %c0_i32_0 = arith.constant 0 : i32
    return %arg0, %c0_i32 : i32, i32
  }
  func.func @transform_1(%arg0: i32) -> (i32, i32) {
    %c0_i32 = arith.constant 0 : i32
    %c0_i32_0 = arith.constant 0 : i32
    %c0_i32_1 = arith.constant 0 : i32
    return %c0_i32, %c0_i32_0 : i32, i32
  }
  func.func @transform_2(%arg0: i32) -> (i32, i32) {
    %c0_i32 = arith.constant 0 : i32
    %c0_i32_0 = arith.constant 0 : i32
    return %arg0, %c0_i32 : i32, i32
  }
}

module attributes {stable_mosaic.version = 11 : i64} {
  func.func @kernel(%arg0: i32, %arg1: memref<8x3xi32, #tpu.memory_space<vmem>>, %arg2: memref<24x128xbf16, #tpu.memory_space<vmem>>, %arg3: memref<8x128xbf16, #tpu.memory_space<vmem>>) attributes {dimension_semantics = [#tpu.dimension_semantics<parallel>], iteration_bounds = array<i64: 2>, scalar_prefetch = 0 : i64, scratch_operands = 0 : i64, tpu.core_type = #tpu.core_type<tc>, window_params = [{transform_indices = @transform_0, window_bounds = array<i64: 8, 3>}, {pipeline_mode = #tpu.pipeline_mode<synchronous>, transform_indices = @transform_1, window_bounds = array<i64: 24, 128>}, {transform_indices = @transform_2, window_bounds = array<i64: 8, 128>}]} {
    %c0 = arith.constant 0 : index
    %c0_0 = arith.constant 0 : index
    %0 = vector.load %arg1[%c0, %c0_0] : memref<8x3xi32, #tpu.memory_space<vmem>>, vector<8x3xi32>
    %1 = tpu.iota {dimensions = array<i32: 1>} : vector<8x24xi32>
    %2 = vector.extract_strided_slice %0 {offsets = [0, 0], sizes = [8, 1], strides = [1, 1]} : vector<8x3xi32> to vector<8x1xi32>
    %c0_i32 = arith.constant 0 : i32
    %3 = vector.broadcast %c0_i32 : i32 to vector<8x1xi32>
    %4 = arith.addi %3, %2 : vector<8x1xi32>
    %5 = vector.broadcast %4 : vector<8x1xi32> to vector<8x24xi32>
    %6 = arith.cmpi eq, %1, %5 : vector<8x24xi32>
    %7 = vector.extract_strided_slice %0 {offsets = [0, 1], sizes = [8, 1], strides = [1, 1]} : vector<8x3xi32> to vector<8x1xi32>
    %c8_i32 = arith.constant 8 : i32
    %8 = vector.broadcast %c8_i32 : i32 to vector<8x1xi32>
    %9 = arith.addi %8, %7 : vector<8x1xi32>
    %10 = vector.broadcast %9 : vector<8x1xi32> to vector<8x24xi32>
    %11 = arith.cmpi eq, %1, %10 : vector<8x24xi32>
    %12 = arith.ori %6, %11 : vector<8x24xi1>
    %13 = vector.extract_strided_slice %0 {offsets = [0, 2], sizes = [8, 1], strides = [1, 1]} : vector<8x3xi32> to vector<8x1xi32>
    %c16_i32 = arith.constant 16 : i32
    %14 = vector.broadcast %c16_i32 : i32 to vector<8x1xi32>
    %15 = arith.addi %14, %13 : vector<8x1xi32>
    %16 = vector.broadcast %15 : vector<8x1xi32> to vector<8x24xi32>
    %17 = arith.cmpi eq, %1, %16 : vector<8x24xi32>
    %18 = arith.ori %12, %17 : vector<8x24xi1>
    %19 = arith.extui %18 : vector<8x24xi1> to vector<8x24xi32>
    %20 = arith.sitofp %19 : vector<8x24xi32> to vector<8x24xf32>
    %21 = arith.truncf %20 : vector<8x24xf32> to vector<8x24xbf16>
    %c0_1 = arith.constant 0 : index
    %c0_2 = arith.constant 0 : index
    %22 = vector.load %arg2[%c0_1, %c0_2] : memref<24x128xbf16, #tpu.memory_space<vmem>>, vector<24x128xbf16>
    %cst = arith.constant dense<0.000000e+00> : vector<8x128xf32>
    %23 = tpu.matmul %21, %22, %cst {dimension_numbers = #tpu.dot_dimension_numbers<[1], [0], [0], [1], [0, 0, 1, 1], [], []>} : vector<8x24xbf16>, vector<24x128xbf16>, vector<8x128xf32> -> vector<8x128xf32>
    %24 = arith.truncf %23 : vector<8x128xf32> to vector<8x128xbf16>
    %c0_3 = arith.constant 0 : index
    %c0_4 = arith.constant 0 : index
    %25 = vector.load %arg3[%c0_3, %c0_4] : memref<8x128xbf16, #tpu.memory_space<vmem>>, vector<8x128xbf16>
    tpu.vector_store %arg3[%c0_3, %c0_4], %24 {strides = array<i32>} : memref<8x128xbf16, #tpu.memory_space<vmem>>, vector<8x128xbf16>,
    return
  }
  func.func @transform_0(%arg0: i32) -> (i32, i32) {
    %c0_i32 = arith.constant 0 : i32
    %c0_i32_0 = arith.constant 0 : i32
    return %arg0, %c0_i32 : i32, i32
  }
  func.func @transform_1(%arg0: i32) -> (i32, i32) {
    %c0_i32 = arith.constant 0 : i32
    %c0_i32_0 = arith.constant 0 : i32
    %c0_i32_1 = arith.constant 0 : i32
    return %c0_i32, %c0_i32_0 : i32, i32
  }
  func.func @transform_2(%arg0: i32) -> (i32, i32) {
    %c0_i32 = arith.constant 0 : i32
    %c0_i32_0 = arith.constant 0 : i32
    return %arg0, %c0_i32 : i32, i32
  }
}

</mosaic_0001>

<llo_original>
// kernel: tpu_custom_call.1
$region0: #{tpu_custom_call.1}
  #allocation0 [shape = 'u32[]', space=smem, size = 0x4, offset = 0x4, fixed_abs, tag = 'smem constant byte address 0x4 - core index']
  #allocation1 [shape = 'u32[144,128]{1,0:T(1,128)}', space=vmem, size = 0x12000, scoped, tag = 'internal scratch']
  %s0 = inlined_call_operand.vmem [shape: s32[16,3], index: 0, kind: input, shape index: {}]
  %s1 = inlined_call_operand.vmem [shape: bf16[24,128], index: 1, kind: input, shape index: {}]
  %s2 = inlined_call_operand.hbm [shape: bf16[16,128], index: 2, kind: output, shape index: {}]
  %s3 = sld [smem:[#allocation0]]
  $region41: #{tpu_custom_call.1} parent=0
    _
  %s5 = ssub.s32 1, %s3
  %s6 = scalar_select 0, %s5, %s3
  $region1: #{tpu_custom_call.1} parent=0
    #allocation2 [shape = 'u8[4096]{0}', space=vmem, size = 0x1000, scoped, tag = 'output window, operand 0']
    #allocation3 [shape = 's32[2]{0}', space=sflag, size = 0x8, scoped, tag = 'scoped memory for tpu_custom_call.1']
    %7 = vsyncpa [#allocation3], 0
    %s8 = scalar_lea.sflag [#allocation3], 1
    %9 = vsyncpa %s8, 0
    loop: start=0, step=1, limit=4
    $region2: #{tpu_custom_call.1} parent=1 // loop_pre_header
      _
    $region3: #{tpu_custom_call.1} parent=1 // loop_header
      %s11 = sphi 0, %s15
      %p12 = scmp.ge.s32.totalorder %s11, 4
      %s21 = sphi 0, %s23
      %s24 = sphi 0, %s21
      %s25 = sphi 0, %s24
      %s41 = sphi 0, %s25
      %s45 = sphi 0, %s45
      %s47 = sphi 0, %s45
      %s48 = sphi 0, %s47
      %s62 = sphi 0, %s48
      %s68 = sphi 0, %s70
      %s71 = sphi 0, %s68
      %s72 = sphi 0, %s71
      %s88 = sphi 0, %s72
    $region4: #{tpu_custom_call.1} parent=1 // loop_header_branch
      %14 = sbr.rel (%p12) target = $region8
    $region5: #{tpu_custom_call.1} parent=1 // loop_body
      %s16 = ssub.s32 %s11, 1
      %s17 = ssub.s32 %s11, 2
      %s18 = sadd.s32 %s11, 1
      %s19 = ssub.s32 %s11, %s18
      %p20 = scmp.eq.s32.totalorder %s19, 0
      %s22 = sadd.s32 %s21, 1
      %s23 = scalar_select %p20, %s21, %s22
      %p26 = pneg %p20
      %p27 = scmp.eq.s32.totalorder %s11, 1
      %p28 = por %p26, %p27
      %p29 = scmp.ne.s32.totalorder %s21, %s24
      %p30 = scmp.eq.s32.totalorder %s11, 0
      %p31 = por %p29, %p30
      %p32 = scmp.ne.s32.totalorder %s21, %s24
      %p33 = scmp.eq.s32.totalorder %s16, 1
      %p34 = por %p32, %p33
      %p35 = scmp.ne.s32.totalorder %s24, %s25
      %p36 = scmp.eq.s32.totalorder %s16, 0
      %p37 = por %p35, %p36
      %p38 = scmp.ne.s32.totalorder %s24, %s25
      %p39 = scmp.eq.s32.totalorder %s17, 1
      %p40 = por %p38, %p39
      %p42 = scmp.ne.s32.totalorder %s25, %s41
      %p43 = scmp.eq.s32.totalorder %s17, 0
      %p44 = por %p42, %p43
      %s46 = sadd.s32 %s45, 1
      %p49 = scmp.eq.s32.totalorder %s11, 1
      %p50 = scmp.ne.s32.totalorder %s45, %s47
      %p51 = scmp.eq.s32.totalorder %s11, 0
      %p52 = por %p50, %p51
      %p53 = scmp.ne.s32.totalorder %s45, %s47
      %p54 = scmp.eq.s32.totalorder %s16, 1
      %p55 = por %p53, %p54
      %p56 = scmp.ne.s32.totalorder %s47, %s48
      %p57 = scmp.eq.s32.totalorder %s16, 0
      %p58 = por %p56, %p57
      %p59 = scmp.ne.s32.totalorder %s47, %s48
      %p60 = scmp.eq.s32.totalorder %s17, 1
      %p61 = por %p59, %p60
      %p63 = scmp.ne.s32.totalorder %s48, %s62
      %p64 = scmp.eq.s32.totalorder %s17, 0
      %p65 = por %p63, %p64
      %s66 = ssub.s32 %s11, %s18
      %p67 = scmp.eq.s32.totalorder %s66, 0
      %s69 = sadd.s32 %s68, 1
      %s70 = scalar_select %p67, %s68, %s69
      %p73 = pneg %p67
      %p74 = scmp.eq.s32.totalorder %s11, 1
      %p75 = por %p73, %p74
      %p76 = scmp.ne.s32.totalorder %s68, %s71
      %p77 = scmp.eq.s32.totalorder %s11, 0
      %p78 = por %p76, %p77
      %p79 = scmp.ne.s32.totalorder %s68, %s71
      %p80 = scmp.eq.s32.totalorder %s16, 1
      %p81 = por %p79, %p80
      %p82 = scmp.ne.s32.totalorder %s71, %s72
      %p83 = scmp.eq.s32.totalorder %s16, 0
      %p84 = por %p82, %p83
      %p85 = scmp.ne.s32.totalorder %s71, %s72
      %p86 = scmp.eq.s32.totalorder %s17, 1
      %p87 = por %p85, %p86
      %p89 = scmp.ne.s32.totalorder %s72, %s88
      %p90 = scmp.eq.s32.totalorder %s17, 0
      %p91 = por %p89, %p90
      %p92 = scmp.le.s32.totalorder 1, %s11
      %p93 = scmp.lt.s32.totalorder %s11, 3
      %p94 = pnand %p92, %p93
      %p95 = pneg %p94
      // Predicated region
      $region9: #{tpu_custom_call.1} parent=5 // pred_check
        _
      $region10: #{tpu_custom_call.1} parent=5 // pred_check_branch
        %97 = sbr.rel (%p94) target = $region12
      $region11: #{tpu_custom_call.1} parent=5 // pred_region
        %s98 = ssub.s32 %s11, 1
        // Predicated region
        $region13: #{tpu_custom_call.1} parent=11 // pred_check
          %p99 = pneg %p58
        $region14: #{tpu_custom_call.1} parent=11 // pred_check_branch
          %101 = sbr.rel (%p99) target = $region16
        $region15: #{tpu_custom_call.1} parent=11 // pred_region
          _
        $region16: #{tpu_custom_call.1} parent=11 // pred_fallthru
          _
      $region12: #{tpu_custom_call.1} parent=5 // pred_fallthru
        _
      %p102 = scmp.lt.s32.totalorder %s11, 2
      // Predicated region
      $region17: #{tpu_custom_call.1} parent=5 // pred_check
        %p103 = pneg %p102
      $region18: #{tpu_custom_call.1} parent=5 // pred_check_branch
        %105 = sbr.rel (%p103) target = $region20
      $region19: #{tpu_custom_call.1} parent=5 // pred_region
        // Predicated region
        $region21: #{tpu_custom_call.1} parent=19 // pred_check
          %p106 = pneg %p31
        $region22: #{tpu_custom_call.1} parent=19 // pred_check_branch
          %108 = sbr.rel (%p106) target = $region24
        $region23: #{tpu_custom_call.1} parent=19 // pred_region
          %p109 = scmp.lt.s32.totalorder %s11, 1
          %s110 = scalar_select %p109, %s11, 1
          %s111 = smul.addr %s110, 8
          %s112 = scalar_lea.vmem %s0, %s111
        $region24: #{tpu_custom_call.1} parent=19 // pred_fallthru
          _
      $region20: #{tpu_custom_call.1} parent=5 // pred_fallthru
        _
      %p113 = scmp.le.s32.totalorder 1, %s11
      %p114 = scmp.lt.s32.totalorder %s11, 3
      %p115 = pnand %p113, %p114
      %p116 = pneg %p115
      // Predicated region
      $region25: #{tpu_custom_call.1} parent=5 // pred_check
        _
      $region26: #{tpu_custom_call.1} parent=5 // pred_check_branch
        %118 = sbr.rel (%p115) target = $region28
      $region27: #{tpu_custom_call.1} parent=5 // pred_region
        %s119 = ssub.s32 %s11, 1
        %p120 = scmp.lt.s32.totalorder %s16, 1
        %s121 = scalar_select %p120, %s16, 1
        %s122 = smul.addr %s121, 8
        %s123 = scalar_lea.vmem %s0, %s122
        %p124 = pneg %p37
        %p125 = pneg %p34
        %p126 = pneg %p58
        %p127 = pneg %p55
        %p128 = pneg %p84
        %p129 = pneg %p81
        %s130 = sand.u32 %s71, 1
        %s131 = scalar_lea.sflag [#allocation3], %s130
        %s132 = sand.u32 %s71, 1
        %s133 = smul.addr %s132, 4
        %s134 = scalar_lea.vmem [#allocation2], %s133
        %p135 = scmp.lt.s32.totalorder %s16, 1
        %s136 = scalar_select %p135, %s16, 1
        %s137 = smul.addr %s136, 8
        %s138 = scalar_lea.vmem %s0, %s137
        %v140 = vld [vmem:[%s138] sm:$0xff]
        %v141 = vlaneseq
        %v142 = vand.u32 %v141, 127
        %143 = vset.pattern.permute.xlu0 0
        %144 = vperm.xlu0 %143, %v140
        %v145 = vpop.permute.xlu0 %144
        %vm146 = vcmp.eq.s32.totalorder %v142, %v145
        %v147 = vadd.s32 %v140, 8
        %148 = vset.pattern.permute.xlu0 1
        %149 = vperm.xlu0 %148, %v147
        %v150 = vpop.permute.xlu0 %149
        %vm151 = vcmp.eq.s32.totalorder %v142, %v150
        %vm152 = vmor %vm146, %vm151
        %v153 = vadd.s32 %v140, 16
        %154 = vset.pattern.permute.xlu0 2
        %155 = vperm.xlu0 %154, %v153
        %v156 = vpop.permute.xlu0 %155
        %vm157 = vcmp.eq.s32.totalorder %v142, %v156
        %vm158 = vmor %vm152, %vm157
        %v159 = vsel %vm158, 1, 0
        %v160 = vcvt.s32.f32 %v159
        %v161 = vpack.c.bf16 %v160, %v160
        %v162 = vld [vmem:[%s1] sm:$0xf]
        %v163 = vld [vmem:[%s1 + $0x4] sm:$0xf]
        %v164 = vld [vmem:[%s1 + $0x8] sm:$0xf]
        %v168 = vunpack.c.l.b16 %v162
        %v169 = vunpack.c.l.b16 %v163
        %v170 = vunpack.c.l.b16 %v164
        %v171 = vpack.c.b16 %v169, %v168
        %v172 = vpack.c.b16 %v170, %v170
        %vm174 = vcmask 195584
        %v176 = vsel %vm174, %v161, 0
        %vm178 = vcmask 1043456
        %v180 = vsel %vm178, %v172, 0
        %182 = vmatprep.subr.bf16.mxu0 0
        %183 = vmatpush1.bf16.msra.mxu0 %v171
        %184 = vmatprep.subr.bf16.mxu0 0
        %185 = vmatpush1.bf16.msra.mxu0 %v180
        %186 = vmatprep.subr.bf16.mxu0 0
        %187 = vmatpush1.bf16.msra.mxu0 0
        %188 = vmatprep.subr.bf16.mxu0 0
        %189 = vmatpush1.bf16.msra.mxu0 0
        %190 = vmatprep.subr.bf16.mxu0 0
        %191 = vmatpush1.bf16.msra.mxu0 0
        %192 = vmatprep.subr.bf16.mxu0 0
        %193 = vmatpush1.bf16.msra.mxu0 0
        %194 = vmatprep.subr.bf16.mxu0 0
        %195 = vmatpush1.bf16.msra.mxu0 0
        %196 = vmatprep.subr.bf16.mxu0 0
        %197 = vmatpush1.bf16.msra.mxu0 0
        %198 = vmatprep.subr.bf16.mxu0 0
        %199 = vmatpush1.bf16.msra.mxu0 0
        %200 = vmatprep.subr.bf16.mxu0 0
        %201 = vmatpush1.bf16.msra.mxu0 0
        %202 = vmatprep.subr.bf16.mxu0 0
        %203 = vmatpush1.bf16.msra.mxu0 0
        %204 = vmatprep.subr.bf16.mxu0 0
        %205 = vmatpush1.bf16.msra.mxu0 0
        %206 = vmatprep.subr.bf16.mxu0 0
        %207 = vmatpush1.bf16.msra.mxu0 0
        %208 = vmatprep.subr.bf16.mxu0 0
        %209 = vmatpush1.bf16.msra.mxu0 0
        %210 = vmatprep.subr.bf16.mxu0 0
        %211 = vmatpush1.bf16.msra.mxu0 0
        %212 = vmatprep.subr.bf16.mxu0 0
        %213 = vmatpush1.bf16.msra.mxu0 0
        %214 = vmatprep.mubr.bf16.mxu0 0
        %215 = vmatmul.mubr.bf16.gmra.mrb[0].mxu0 %v176
        %v216 = vpop.f32.mrb[0].mxu0
        %v217 = vadd.f32 0.0, %v216
        %v218 = vpop.f32.mrb[0].mxu0
        %v219 = vpop.f32.mrb[0].mxu0
        %v220 = vpop.f32.mrb[0].mxu0
        %221 = vdwg.mxu0
        %v222 = vpack.c.bf16 %v217, %v217
        %223 = vst [vmem:[%s134] sm:$0xf] %v222
        %s224 = sand.u32 %s71, 1
        %s225 = scalar_lea.sflag [#allocation3], %s224
        %s226 = sand.u32 %s71, 1
        %s227 = smul.addr %s226, 4
        %s228 = scalar_lea.vmem [#allocation2], %s227
        // Predicated region
        $region29: #{tpu_custom_call.1} parent=27 // pred_check
          %p229 = pneg %p81
        $region30: #{tpu_custom_call.1} parent=27 // pred_check_branch
          %231 = sbr.rel (%p229) target = $region32
        $region31: #{tpu_custom_call.1} parent=27 // pred_region
          %s233 = ssub.s32 64, 64
          %234 = vsyncadd %s225, %s233
          %s235 = smul.addr %s16, 64
          %s236 = scalar_lea.hbm %s2, %s235
          %s238 = sshll.u32 %s228, 4
          %s239 = int_to_ptr.vmem [resolvable:$true] %s238
          %241 = dma.vmem_to_hbm [thread:$0]  %s239, 64, %s236, %s225
        $region32: #{tpu_custom_call.1} parent=27 // pred_fallthru
          _
      $region28: #{tpu_custom_call.1} parent=5 // pred_fallthru
        _
      %p242 = scmp.le.s32.totalorder 2, %s11
      // Predicated region
      $region33: #{tpu_custom_call.1} parent=5 // pred_check
        %p243 = pneg %p242
      $region34: #{tpu_custom_call.1} parent=5 // pred_check_branch
        %245 = sbr.rel (%p243) target = $region36
      $region35: #{tpu_custom_call.1} parent=5 // pred_region
        %s246 = ssub.s32 %s11, 2
        // Predicated region
        $region37: #{tpu_custom_call.1} parent=35 // pred_check
          %p247 = pneg %p87
        $region38: #{tpu_custom_call.1} parent=35 // pred_check_branch
          %249 = sbr.rel (%p247) target = $region40
        $region39: #{tpu_custom_call.1} parent=35 // pred_region
          %s250 = sand.u32 %s72, 1
          %s251 = scalar_lea.sflag [#allocation3], %s250
          %s252 = sand.u32 %s72, 1
          %s253 = smul.addr %s252, 4
          %s254 = scalar_lea.vmem [#allocation2], %s253
          %255 = dma.done %s251, 64
        $region40: #{tpu_custom_call.1} parent=35 // pred_fallthru
          _
      $region36: #{tpu_custom_call.1} parent=5 // pred_fallthru
        _
    $region6: #{tpu_custom_call.1} parent=1 // loop_footer
      %s15 = sadd.s32 1, %s11
    $region7: #{tpu_custom_call.1} parent=1 // loop_footer_branch
      %10 = sbr.rel target = $region3
    $region8: #{tpu_custom_call.1} parent=1 // loop_exit
      _
    %256 = vsyncpa [#allocation3], 1
    %s257 = scalar_lea.sflag [#allocation3], 1
    %258 = vsyncpa %s257, 1

// kernel: tpu_custom_call.1
$region0: #{tpu_custom_call.1}
  #allocation0 [shape = 'u32[]', space=smem, size = 0x4, offset = 0x4, fixed_abs, tag = 'smem constant byte address 0x4 - core index']
  #allocation1 [shape = 'u32[144,128]{1,0:T(1,128)}', space=vmem, size = 0x12000, scoped, tag = 'internal scratch']
  %s0 = inlined_call_operand.vmem [shape: s32[16,3], index: 0, kind: input, shape index: {}]
  %s1 = inlined_call_operand.vmem [shape: bf16[24,128], index: 1, kind: input, shape index: {}]
  %s2 = inlined_call_operand.hbm [shape: bf16[16,128], index: 2, kind: output, shape index: {}]
  %s3 = sld [smem:[#allocation0]]
  $region41: #{tpu_custom_call.1} parent=0
    _
  %s5 = ssub.s32 1, %s3
  %s6 = scalar_select 0, %s5, %s3
  $region1: #{tpu_custom_call.1} parent=0
    #allocation2 [shape = 'u8[4096]{0}', space=vmem, size = 0x1000, scoped, tag = 'output window, operand 0']
    #allocation3 [shape = 's32[2]{0}', space=sflag, size = 0x8, scoped, tag = 'scoped memory for tpu_custom_call.1']
    %7 = vsyncpa [#allocation3], 0
    %s8 = scalar_lea.sflag [#allocation3], 1
    %9 = vsyncpa %s8, 0
    loop: start=0, step=1, limit=4
    $region2: #{tpu_custom_call.1} parent=1 // loop_pre_header
      _
    $region3: #{tpu_custom_call.1} parent=1 // loop_header
      %s11 = sphi 0, %s15
      %p12 = scmp.ge.s32.totalorder %s11, 4
      %s21 = sphi 0, %s23
      %s24 = sphi 0, %s21
      %s25 = sphi 0, %s24
      %s41 = sphi 0, %s25
      %s45 = sphi 0, %s45
      %s47 = sphi 0, %s45
      %s48 = sphi 0, %s47
      %s62 = sphi 0, %s48
      %s68 = sphi 0, %s70
      %s71 = sphi 0, %s68
      %s72 = sphi 0, %s71
      %s88 = sphi 0, %s72
    $region4: #{tpu_custom_call.1} parent=1 // loop_header_branch
      %14 = sbr.rel (%p12) target = $region8
    $region5: #{tpu_custom_call.1} parent=1 // loop_body
      %s16 = ssub.s32 %s11, 1
      %s17 = ssub.s32 %s11, 2
      %s18 = sadd.s32 %s11, 1
      %s19 = ssub.s32 %s11, %s18
      %p20 = scmp.eq.s32.totalorder %s19, 0
      %s22 = sadd.s32 %s21, 1
      %s23 = scalar_select %p20, %s21, %s22
      %p26 = pneg %p20
      %p27 = scmp.eq.s32.totalorder %s11, 1
      %p28 = por %p26, %p27
      %p29 = scmp.ne.s32.totalorder %s21, %s24
      %p30 = scmp.eq.s32.totalorder %s11, 0
      %p31 = por %p29, %p30
      %p32 = scmp.ne.s32.totalorder %s21, %s24
      %p33 = scmp.eq.s32.totalorder %s16, 1
      %p34 = por %p32, %p33
      %p35 = scmp.ne.s32.totalorder %s24, %s25
      %p36 = scmp.eq.s32.totalorder %s16, 0
      %p37 = por %p35, %p36
      %p38 = scmp.ne.s32.totalorder %s24, %s25
      %p39 = scmp.eq.s32.totalorder %s17, 1
      %p40 = por %p38, %p39
      %p42 = scmp.ne.s32.totalorder %s25, %s41
      %p43 = scmp.eq.s32.totalorder %s17, 0
      %p44 = por %p42, %p43
      %s46 = sadd.s32 %s45, 1
      %p49 = scmp.eq.s32.totalorder %s11, 1
      %p50 = scmp.ne.s32.totalorder %s45, %s47
      %p51 = scmp.eq.s32.totalorder %s11, 0
      %p52 = por %p50, %p51
      %p53 = scmp.ne.s32.totalorder %s45, %s47
      %p54 = scmp.eq.s32.totalorder %s16, 1
      %p55 = por %p53, %p54
      %p56 = scmp.ne.s32.totalorder %s47, %s48
      %p57 = scmp.eq.s32.totalorder %s16, 0
      %p58 = por %p56, %p57
      %p59 = scmp.ne.s32.totalorder %s47, %s48
      %p60 = scmp.eq.s32.totalorder %s17, 1
      %p61 = por %p59, %p60
      %p63 = scmp.ne.s32.totalorder %s48, %s62
      %p64 = scmp.eq.s32.totalorder %s17, 0
      %p65 = por %p63, %p64
      %s66 = ssub.s32 %s11, %s18
      %p67 = scmp.eq.s32.totalorder %s66, 0
      %s69 = sadd.s32 %s68, 1
      %s70 = scalar_select %p67, %s68, %s69
      %p73 = pneg %p67
      %p74 = scmp.eq.s32.totalorder %s11, 1
      %p75 = por %p73, %p74
      %p76 = scmp.ne.s32.totalorder %s68, %s71
      %p77 = scmp.eq.s32.totalorder %s11, 0
      %p78 = por %p76, %p77
      %p79 = scmp.ne.s32.totalorder %s68, %s71
      %p80 = scmp.eq.s32.totalorder %s16, 1
      %p81 = por %p79, %p80
      %p82 = scmp.ne.s32.totalorder %s71, %s72
      %p83 = scmp.eq.s32.totalorder %s16, 0
      %p84 = por %p82, %p83
      %p85 = scmp.ne.s32.totalorder %s71, %s72
      %p86 = scmp.eq.s32.totalorder %s17, 1
      %p87 = por %p85, %p86
      %p89 = scmp.ne.s32.totalorder %s72, %s88
      %p90 = scmp.eq.s32.totalorder %s17, 0
      %p91 = por %p89, %p90
      %p92 = scmp.le.s32.totalorder 1, %s11
      %p93 = scmp.lt.s32.totalorder %s11, 3
      %p94 = pnand %p92, %p93
      %p95 = pneg %p94
      // Predicated region
      $region9: #{tpu_custom_call.1} parent=5 // pred_check
        _
      $region10: #{tpu_custom_call.1} parent=5 // pred_check_branch
        %97 = sbr.rel (%p94) target = $region12
      $region11: #{tpu_custom_call.1} parent=5 // pred_region
        %s98 = ssub.s32 %s11, 1
        // Predicated region
        $region13: #{tpu_custom_call.1} parent=11 // pred_check
          %p99 = pneg %p58
        $region14: #{tpu_custom_call.1} parent=11 // pred_check_branch
          %101 = sbr.rel (%p99) target = $region16
        $region15: #{tpu_custom_call.1} parent=11 // pred_region
          _
        $region16: #{tpu_custom_call.1} parent=11 // pred_fallthru
          _
      $region12: #{tpu_custom_call.1} parent=5 // pred_fallthru
        _
      %p102 = scmp.lt.s32.totalorder %s11, 2
      // Predicated region
      $region17: #{tpu_custom_call.1} parent=5 // pred_check
        %p103 = pneg %p102
      $region18: #{tpu_custom_call.1} parent=5 // pred_check_branch
        %105 = sbr.rel (%p103) target = $region20
      $region19: #{tpu_custom_call.1} parent=5 // pred_region
        // Predicated region
        $region21: #{tpu_custom_call.1} parent=19 // pred_check
          %p106 = pneg %p31
        $region22: #{tpu_custom_call.1} parent=19 // pred_check_branch
          %108 = sbr.rel (%p106) target = $region24
        $region23: #{tpu_custom_call.1} parent=19 // pred_region
          %p109 = scmp.lt.s32.totalorder %s11, 1
          %s110 = scalar_select %p109, %s11, 1
          %s111 = smul.addr %s110, 8
          %s112 = scalar_lea.vmem %s0, %s111
        $region24: #{tpu_custom_call.1} parent=19 // pred_fallthru
          _
      $region20: #{tpu_custom_call.1} parent=5 // pred_fallthru
        _
      %p113 = scmp.le.s32.totalorder 1, %s11
      %p114 = scmp.lt.s32.totalorder %s11, 3
      %p115 = pnand %p113, %p114
      %p116 = pneg %p115
      // Predicated region
      $region25: #{tpu_custom_call.1} parent=5 // pred_check
        _
      $region26: #{tpu_custom_call.1} parent=5 // pred_check_branch
        %118 = sbr.rel (%p115) target = $region28
      $region27: #{tpu_custom_call.1} parent=5 // pred_region
        %s119 = ssub.s32 %s11, 1
        %p120 = scmp.lt.s32.totalorder %s16, 1
        %s121 = scalar_select %p120, %s16, 1
        %s122 = smul.addr %s121, 8
        %s123 = scalar_lea.vmem %s0, %s122
        %p124 = pneg %p37
        %p125 = pneg %p34
        %p126 = pneg %p58
        %p127 = pneg %p55
        %p128 = pneg %p84
        %p129 = pneg %p81
        %s130 = sand.u32 %s71, 1
        %s131 = scalar_lea.sflag [#allocation3], %s130
        %s132 = sand.u32 %s71, 1
        %s133 = smul.addr %s132, 4
        %s134 = scalar_lea.vmem [#allocation2], %s133
        %p135 = scmp.lt.s32.totalorder %s16, 1
        %s136 = scalar_select %p135, %s16, 1
        %s137 = smul.addr %s136, 8
        %s138 = scalar_lea.vmem %s0, %s137
        %v140 = vld [vmem:[%s138] sm:$0xff]
        %v141 = vlaneseq
        %v142 = vand.u32 %v141, 127
        %143 = vset.pattern.permute.xlu0 0
        %144 = vperm.xlu0 %143, %v140
        %v145 = vpop.permute.xlu0 %144
        %vm146 = vcmp.eq.s32.totalorder %v142, %v145
        %v147 = vadd.s32 %v140, 8
        %148 = vset.pattern.permute.xlu0 1
        %149 = vperm.xlu0 %148, %v147
        %v150 = vpop.permute.xlu0 %149
        %vm151 = vcmp.eq.s32.totalorder %v142, %v150
        %vm152 = vmor %vm146, %vm151
        %v153 = vadd.s32 %v140, 16
        %154 = vset.pattern.permute.xlu0 2
        %155 = vperm.xlu0 %154, %v153
        %v156 = vpop.permute.xlu0 %155
        %vm157 = vcmp.eq.s32.totalorder %v142, %v156
        %vm158 = vmor %vm152, %vm157
        %v159 = vsel %vm158, 1, 0
        %v160 = vcvt.s32.f32 %v159
        %v161 = vpack.c.bf16 %v160, %v160
        %v162 = vld [vmem:[%s1] sm:$0xf]
        %v163 = vld [vmem:[%s1 + $0x4] sm:$0xf]
        %v164 = vld [vmem:[%s1 + $0x8] sm:$0xf]
        %v168 = vunpack.c.l.b16 %v162
        %v169 = vunpack.c.l.b16 %v163
        %v170 = vunpack.c.l.b16 %v164
        %v171 = vpack.c.b16 %v169, %v168
        %v172 = vpack.c.b16 %v170, %v170
        %vm174 = vcmask 195584
        %v176 = vsel %vm174, %v161, 0
        %vm178 = vcmask 1043456
        %v180 = vsel %vm178, %v172, 0
        %182 = vmatprep.subr.bf16.mxu0 0
        %183 = vmatpush1.bf16.msra.mxu0 %v171
        %184 = vmatprep.subr.bf16.mxu0 0
        %185 = vmatpush1.bf16.msra.mxu0 %v180
        %186 = vmatprep.subr.bf16.mxu0 0
        %187 = vmatpush1.bf16.msra.mxu0 0
        %188 = vmatprep.subr.bf16.mxu0 0
        %189 = vmatpush1.bf16.msra.mxu0 0
        %190 = vmatprep.subr.bf16.mxu0 0
        %191 = vmatpush1.bf16.msra.mxu0 0
        %192 = vmatprep.subr.bf16.mxu0 0
        %193 = vmatpush1.bf16.msra.mxu0 0
        %194 = vmatprep.subr.bf16.mxu0 0
        %195 = vmatpush1.bf16.msra.mxu0 0
        %196 = vmatprep.subr.bf16.mxu0 0
        %197 = vmatpush1.bf16.msra.mxu0 0
        %198 = vmatprep.subr.bf16.mxu0 0
        %199 = vmatpush1.bf16.msra.mxu0 0
        %200 = vmatprep.subr.bf16.mxu0 0
        %201 = vmatpush1.bf16.msra.mxu0 0
        %202 = vmatprep.subr.bf16.mxu0 0
        %203 = vmatpush1.bf16.msra.mxu0 0
        %204 = vmatprep.subr.bf16.mxu0 0
        %205 = vmatpush1.bf16.msra.mxu0 0
        %206 = vmatprep.subr.bf16.mxu0 0
        %207 = vmatpush1.bf16.msra.mxu0 0
        %208 = vmatprep.subr.bf16.mxu0 0
        %209 = vmatpush1.bf16.msra.mxu0 0
        %210 = vmatprep.subr.bf16.mxu0 0
        %211 = vmatpush1.bf16.msra.mxu0 0
        %212 = vmatprep.subr.bf16.mxu0 0
        %213 = vmatpush1.bf16.msra.mxu0 0
        %214 = vmatprep.mubr.bf16.mxu0 0
        %215 = vmatmul.mubr.bf16.gmra.mrb[0].mxu0 %v176
        %v216 = vpop.f32.mrb[0].mxu0
        %v217 = vadd.f32 0.0, %v216
        %v218 = vpop.f32.mrb[0].mxu0
        %v219 = vpop.f32.mrb[0].mxu0
        %v220 = vpop.f32.mrb[0].mxu0
        %221 = vdwg.mxu0
        %v222 = vpack.c.bf16 %v217, %v217
        %223 = vst [vmem:[%s134] sm:$0xf] %v222
        %s224 = sand.u32 %s71, 1
        %s225 = scalar_lea.sflag [#allocation3], %s224
        %s226 = sand.u32 %s71, 1
        %s227 = smul.addr %s226, 4
        %s228 = scalar_lea.vmem [#allocation2], %s227
        // Predicated region
        $region29: #{tpu_custom_call.1} parent=27 // pred_check
          %p229 = pneg %p81
        $region30: #{tpu_custom_call.1} parent=27 // pred_check_branch
          %231 = sbr.rel (%p229) target = $region32
        $region31: #{tpu_custom_call.1} parent=27 // pred_region
          %s233 = ssub.s32 64, 64
          %234 = vsyncadd %s225, %s233
          %s235 = smul.addr %s16, 64
          %s236 = scalar_lea.hbm %s2, %s235
          %s238 = sshll.u32 %s228, 4
          %s239 = int_to_ptr.vmem [resolvable:$true] %s238
          %241 = dma.vmem_to_hbm [thread:$0]  %s239, 64, %s236, %s225
        $region32: #{tpu_custom_call.1} parent=27 // pred_fallthru
          _
      $region28: #{tpu_custom_call.1} parent=5 // pred_fallthru
        _
      %p242 = scmp.le.s32.totalorder 2, %s11
      // Predicated region
      $region33: #{tpu_custom_call.1} parent=5 // pred_check
        %p243 = pneg %p242
      $region34: #{tpu_custom_call.1} parent=5 // pred_check_branch
        %245 = sbr.rel (%p243) target = $region36
      $region35: #{tpu_custom_call.1} parent=5 // pred_region
        %s246 = ssub.s32 %s11, 2
        // Predicated region
        $region37: #{tpu_custom_call.1} parent=35 // pred_check
          %p247 = pneg %p87
        $region38: #{tpu_custom_call.1} parent=35 // pred_check_branch
          %249 = sbr.rel (%p247) target = $region40
        $region39: #{tpu_custom_call.1} parent=35 // pred_region
          %s250 = sand.u32 %s72, 1
          %s251 = scalar_lea.sflag [#allocation3], %s250
          %s252 = sand.u32 %s72, 1
          %s253 = smul.addr %s252, 4
          %s254 = scalar_lea.vmem [#allocation2], %s253
          %255 = dma.done %s251, 64
        $region40: #{tpu_custom_call.1} parent=35 // pred_fallthru
          _
      $region36: #{tpu_custom_call.1} parent=5 // pred_fallthru
        _
    $region6: #{tpu_custom_call.1} parent=1 // loop_footer
      %s15 = sadd.s32 1, %s11
    $region7: #{tpu_custom_call.1} parent=1 // loop_footer_branch
      %10 = sbr.rel target = $region3
    $region8: #{tpu_custom_call.1} parent=1 // loop_exit
      _
    %256 = vsyncpa [#allocation3], 1
    %s257 = scalar_lea.sflag [#allocation3], 1
    %258 = vsyncpa %s257, 1

</llo_original>
